<compile_context>
chip_gen: v7x
topology: tpu7x:2x2x1
jax: 0.10.0
libtpu: 0.0.40
codegen_flags: <defaults>
</compile_context>

<pallas_src>
import functools

import jax
import jax.numpy as jnp
from jax.experimental import pallas as pl
from jax.experimental.pallas import tpu as pltpu

ALPHA = 1.0
GAMMA = 2.0  # gamma == 2 is implemented as an explicit square (VPU mul, no pow/EUP/log)

_VMEM_LIMIT_BYTES = 32 * 1024 * 1024   # scoped VMEM limit safe on v5e/v6e/v7x
_TILE_BYTES_BUDGET = 20 * 1024 * 1024  # per-tile budget for the double-buffered inputs
_MAX_TILE_ROWS = 8192


def _choose_tile_rows(n: int, c: int, logits_itemsize: int) -> int:
    """Biggest row tile that keeps the double-buffered inputs inside the VMEM budget."""
    per_row = 2 * (c * logits_itemsize + 4)   # 2 buffers each: logits row + int32 target
    tn = _TILE_BYTES_BUDGET // max(per_row, 1)
    tn = int(min(tn, _MAX_TILE_ROWS, n))
    if tn >= n:
        return n                              # one full-extent block
    return max(8, (tn // 8) * 8)              # keep the sublane dim 8-aligned


def _focal_loss_kernel(logits_ref, targets_ref, out_ref, *, total_n, tile_rows):
    i = pl.program_id(0)

    logits = logits_ref[...].astype(jnp.float32)    # (TN, C), f32 compute (bf16 ok in HBM)
    tgt = targets_ref[...]                          # (TN, 1) int32

    tn, c = logits.shape
    col = jax.lax.broadcasted_iota(jnp.int32, (tn, c), 1)
    onehot = col == tgt                             # (TN, C) bool

    # numerically stable log-sum-exp (log-softmax denominator), XLU lane reductions
    m = jnp.max(logits, axis=1, keepdims=True)                               # (TN, 1)
    lse = m + jnp.log(jnp.sum(jnp.exp(logits - m), axis=1, keepdims=True))   # (TN, 1)

    # target-class logit via one-hot masked reduction (no gather needed)
    tgt_logit = jnp.sum(jnp.where(onehot, logits, 0.0), axis=1, keepdims=True)

    ce = jnp.maximum(lse - tgt_logit, 0.0)          # clamp so 1 - exp(-ce) >= 0
    pt = jnp.exp(-ce)
    w = 1.0 - pt
    f_loss = ALPHA * w * w * ce                     # (1 - pt)**2 as an explicit square

    # mask rows of a ragged last tile (rows >= total_n contribute 0)
    row = jax.lax.broadcasted_iota(jnp.int32, (tn, 1), 0) + i * tile_rows
    partial = jnp.sum(jnp.where(row < total_n, f_loss, 0.0))

    # one lane-aligned (8, 128) tile per grid step, filled with the partial sum
    out_ref[...] = jnp.full(out_ref.shape, partial, dtype=jnp.float32)


def focal_loss(logits, targets, tile_rows=None):
    """logits: (N, C) float (f32 or bf16); targets: (N,) int class ids. Returns scalar f32."""
    n, c = logits.shape
    targets2d = targets.astype(jnp.int32).reshape(n, 1)

    tn = tile_rows if tile_rows is not None else _choose_tile_rows(
        n, c, jnp.dtype(logits.dtype).itemsize)
    grid = (pl.cdiv(n, tn),)

    kernel = functools.partial(_focal_loss_kernel, total_n=n, tile_rows=tn)

    partial_tiles = pl.pallas_call(
        kernel,
        out_shape=jax.ShapeDtypeStruct((grid[0], 8, 128), jnp.float32),
        grid=grid,
        in_specs=[
            pl.BlockSpec((tn, c), lambda i: (i, 0)),     # logits row tile
            pl.BlockSpec((tn, 1), lambda i: (i, 0)),     # targets row tile
        ],
        out_specs=pl.BlockSpec((1, 8, 128), lambda i: (i, 0, 0)),
        compiler_params=pltpu.CompilerParams(
            dimension_semantics=("parallel",),
            vmem_limit_bytes=_VMEM_LIMIT_BYTES,
        ),
    )(logits, targets2d)

    # reduce=True -> mean over all samples; divide by the true N (not per-block means).
    return jnp.sum(partial_tiles[:, 0, 0]) / jnp.float32(n)


def focal_loss_ref(logits, targets):
    """Pure-JAX reference (mirrors torch CrossEntropyLoss + focal weighting)."""
    logp = jax.nn.log_softmax(logits.astype(jnp.float32), axis=-1)
    ce = -jnp.take_along_axis(logp, targets[:, None].astype(jnp.int32), axis=-1)[:, 0]
    ce = jnp.maximum(ce, 0.0)
    pt = jnp.exp(-ce)
    w = 1.0 - pt
    return jnp.mean(ALPHA * w * w * ce)


if __name__ == "__main__":
    key = jax.random.PRNGKey(0)
    k1, k2, k3, k4 = jax.random.split(key, 4)

    # Small shape implied by the module's forward: (N, C) logits + (N,) class indices.
    n, c = 8, 32
    logits = jax.random.normal(k1, (n, c), dtype=jnp.float32)
    targets = jax.random.randint(k2, (n,), 0, c, dtype=jnp.int32)
    loss = focal_loss(logits, targets)
    jax.block_until_ready(loss)
    ref = focal_loss_ref(logits, targets)
    assert jnp.allclose(loss, ref, rtol=1e-5, atol=1e-6), (loss, ref)

    # Multi-tile path with a ragged last block (grid > 1, row masking), still small.
    n2, c2 = 1000, 96
    logits2 = jax.random.normal(k3, (n2, c2), dtype=jnp.float32)
    targets2 = jax.random.randint(k4, (n2,), 0, c2, dtype=jnp.int32)
    loss2 = focal_loss(logits2, targets2, tile_rows=128)
    jax.block_until_ready(loss2)
    ref2 = focal_loss_ref(logits2, targets2)
    assert jnp.allclose(loss2, ref2, rtol=1e-5, atol=1e-5), (loss2, ref2)

    # bf16 storage halves HBM traffic (mem-bound kernel); compute stays f32 in-kernel.
    logits2_bf16 = logits2.astype(jnp.bfloat16)
    loss3 = focal_loss(logits2_bf16, targets2, tile_rows=128)
    jax.block_until_ready(loss3)
    ref3 = focal_loss_ref(logits2_bf16.astype(jnp.float32), targets2)
    assert jnp.allclose(loss3, ref3, rtol=1e-4, atol=1e-4), (loss3, ref3)

    print("KERNEL_OK")
</pallas_src>

<mosaic_0001>
module attributes {stable_mosaic.version = 11 : i64} {
  func.func @_focal_loss_kernel(%arg0: i32, %arg1: memref<8x32xf32, #tpu.memory_space<vmem>>, %arg2: memref<8x1xi32, #tpu.memory_space<vmem>>, %arg3: memref<1x8x128xf32, #tpu.memory_space<vmem>>) attributes {dimension_semantics = [#tpu.dimension_semantics<parallel>], iteration_bounds = array<i64: 1>, scalar_prefetch = 0 : i64, scratch_operands = 0 : i64, tpu.core_type = #tpu.core_type<tc>, window_params = [{transform_indices = @transform_0, window_bounds = array<i64: 8, 32>}, {transform_indices = @transform_1, window_bounds = array<i64: 8, 1>}, {transform_indices = @transform_2, window_bounds = array<i64: 1, 8, 128>}]} {
    %c0 = arith.constant 0 : index
    %c0_0 = arith.constant 0 : index
    %0 = vector.load %arg1[%c0, %c0_0] : memref<8x32xf32, #tpu.memory_space<vmem>>, vector<8x32xf32>
    %c0_1 = arith.constant 0 : index
    %c0_2 = arith.constant 0 : index
    %1 = vector.load %arg2[%c0_1, %c0_2] : memref<8x1xi32, #tpu.memory_space<vmem>>, vector<8x1xi32>
    %2 = tpu.iota {dimensions = array<i32: 1>} : vector<8x32xi32>
    %3 = vector.broadcast %1 : vector<8x1xi32> to vector<8x32xi32>
    %4 = arith.cmpi eq, %2, %3 : vector<8x32xi32>
    %cst = arith.constant dense<0xFF800000> : vector<8xf32>
    %5 = vector.multi_reduction <maximumf>, %0, %cst [1] : vector<8x32xf32> to vector<8xf32>
    %6 = vector.shape_cast %5 : vector<8xf32> to vector<8x1xf32>
    %7 = vector.broadcast %6 : vector<8x1xf32> to vector<8x32xf32>
    %8 = arith.subf %0, %7 : vector<8x32xf32>
    %9 = math.exp %8 : vector<8x32xf32>
    %cst_3 = arith.constant dense<0.000000e+00> : vector<8xf32>
    %10 = vector.multi_reduction <add>, %9, %cst_3 [1] : vector<8x32xf32> to vector<8xf32>
    %11 = vector.shape_cast %10 : vector<8xf32> to vector<8x1xf32>
    %12 = math.log %11 : vector<8x1xf32>
    %13 = arith.addf %6, %12 : vector<8x1xf32>
    %cst_4 = arith.constant 0.000000e+00 : f32
    %14 = vector.broadcast %cst_4 : f32 to vector<8x32xf32>
    %15 = arith.select %4, %0, %14 : vector<8x32xi1>, vector<8x32xf32>
    %cst_5 = arith.constant dense<0.000000e+00> : vector<8xf32>
    %16 = vector.multi_reduction <add>, %15, %cst_5 [1] : vector<8x32xf32> to vector<8xf32>
    %17 = vector.shape_cast %16 : vector<8xf32> to vector<8x1xf32>
    %18 = arith.subf %13, %17 : vector<8x1xf32>
    %cst_6 = arith.constant 0.000000e+00 : f32
    %19 = vector.broadcast %cst_6 : f32 to vector<8x1xf32>
    %20 = arith.maximumf %18, %19 : vector<8x1xf32>
    %cst_7 = arith.constant 0.000000e+00 : f32
    %21 = vector.broadcast %cst_7 : f32 to vector<8x1xf32>
    %22 = arith.subf %21, %20 : vector<8x1xf32>
    %23 = math.exp %22 : vector<8x1xf32>
    %cst_8 = arith.constant 1.000000e+00 : f32
    %24 = vector.broadcast %cst_8 : f32 to vector<8x1xf32>
    %25 = arith.subf %24, %23 : vector<8x1xf32>
    %cst_9 = arith.constant 1.000000e+00 : f32
    %26 = vector.broadcast %cst_9 : f32 to vector<8x1xf32>
    %27 = arith.mulf %26, %25 : vector<8x1xf32>
    %28 = arith.mulf %27, %25 : vector<8x1xf32>
    %29 = arith.mulf %28, %20 : vector<8x1xf32>
    %30 = tpu.iota {dimensions = array<i32: 0>} : vector<8x1xi32>
    %c8_i32 = arith.constant 8 : i32
    %31 = arith.muli %arg0, %c8_i32 : i32
    %32 = vector.broadcast %31 : i32 to vector<8x1xi32>
    %33 = arith.addi %30, %32 : vector<8x1xi32>
    %c8_i32_10 = arith.constant 8 : i32
    %34 = vector.broadcast %c8_i32_10 : i32 to vector<8x1xi32>
    %35 = arith.cmpi slt, %33, %34 : vector<8x1xi32>
    %cst_11 = arith.constant 0.000000e+00 : f32
    %36 = vector.broadcast %cst_11 : f32 to vector<8x1xf32>
    %37 = arith.select %35, %29, %36 : vector<8x1xi1>, vector<8x1xf32>
    %38 = vector.shape_cast %37 : vector<8x1xf32> to vector<1x8x1xf32>
    %cst_12 = arith.constant dense<0.000000e+00> : vector<1xf32>
    %39 = vector.multi_reduction <add>, %38, %cst_12 [1, 2] : vector<1x8x1xf32> to vector<1xf32>
    %40 = vector.shape_cast %39 : vector<1xf32> to vector<1x1x1xf32>
    %41 = vector.extract %40[0, 0, 0] : f32 from vector<1x1x1xf32>
    %42 = vector.broadcast %41 : f32 to vector<1x8x128xf32>
    %c0_13 = arith.constant 0 : index
    %c0_14 = arith.constant 0 : index
    %c0_15 = arith.constant 0 : index
    %43 = vector.load %arg3[%c0_13, %c0_14, %c0_15] : memref<1x8x128xf32, #tpu.memory_space<vmem>>, vector<1x8x128xf32>
    tpu.vector_store %arg3[%c0_13, %c0_14, %c0_15], %42 {strides = array<i32>} : memref<1x8x128xf32, #tpu.memory_space<vmem>>, vector<1x8x128xf32>,
    return
  }
  func.func @transform_0(%arg0: i32) -> (i32, i32) {
    %c0_i32 = arith.constant 0 : i32
    %c0_i32_0 = arith.constant 0 : i32
    return %arg0, %c0_i32 : i32, i32
  }
  func.func @transform_1(%arg0: i32) -> (i32, i32) {
    %c0_i32 = arith.constant 0 : i32
    %c0_i32_0 = arith.constant 0 : i32
    return %arg0, %c0_i32 : i32, i32
  }
  func.func @transform_2(%arg0: i32) -> (i32, i32, i32) {
    %c0_i32 = arith.constant 0 : i32
    %c0_i32_0 = arith.constant 0 : i32
    %c0_i32_1 = arith.constant 0 : i32
    return %arg0, %c0_i32, %c0_i32_0 : i32, i32, i32
  }
}

</mosaic_0001>

<llo_original>
// kernel: tpu_custom_call.1
$region0: #{tpu_custom_call.1}
  #allocation0 [shape = 'u32[]', space=smem, size = 0x4, offset = 0x4, fixed_abs, tag = 'smem constant byte address 0x4 - core index']
  #allocation1 [shape = 'u32[144,128]{1,0:T(1,128)}', space=vmem, size = 0x12000, scoped, tag = 'internal scratch']
  %s0 = inlined_call_operand.vmem [shape: f32[8,32], index: 0, kind: input, shape index: {}]
  %s1 = inlined_call_operand.vmem [shape: s32[8,1], index: 1, kind: input, shape index: {}]
  %s2 = inlined_call_operand.hbm [shape: f32[1,8,128], index: 2, kind: output, shape index: {}]
  %s3 = sld [smem:[#allocation0]]
  $region18: #{tpu_custom_call.1} parent=0
    _
  %s5 = ssub.s32 1, %s3
  %s6 = scalar_select 0, %s5, %s3
  $region1: #{tpu_custom_call.1} parent=0
    #allocation2 [shape = 'u8[4096]{0}', space=vmem, size = 0x1000, scoped, tag = 'output window, operand 0, single buffered']
    #allocation3 [shape = 's32[1]{0}', space=sflag, size = 0x4, scoped, tag = 'scoped memory for tpu_custom_call.1']
    %7 = vsyncpa [#allocation3], 0
    // Predicated region
    $region2: #{tpu_custom_call.1} parent=1 // pred_check
      _
    $region3: #{tpu_custom_call.1} parent=1 // pred_check_branch
      %9 = sbr.rel (0) target = $region5
    $region4: #{tpu_custom_call.1} parent=1 // pred_region
      _
    $region5: #{tpu_custom_call.1} parent=1 // pred_fallthru
      _
    // Predicated region
    $region6: #{tpu_custom_call.1} parent=1 // pred_check
      _
    $region7: #{tpu_custom_call.1} parent=1 // pred_check_branch
      %11 = sbr.rel (0) target = $region9
    $region8: #{tpu_custom_call.1} parent=1 // pred_region
      _
    $region9: #{tpu_custom_call.1} parent=1 // pred_fallthru
      _
    %v12 = vld [vmem:[%s0] sm:$0xff]
    %v13 = vld [vmem:[%s1] sm:$0xff]
    %v14 = vlaneseq
    %v15 = vand.u32 %v14, 127
    %16 = vset.pattern.permute.xlu0 0
    %17 = vperm.xlu0 %16, %v13
    %v18 = vpop.permute.xlu0 %17
    %vm19 = vcmp.eq.s32.totalorder %v15, %v18
    %vm20 = vcmask 261120
    %v21 = vsel %vm20, %v12, -inf
    %22 = vmax.xlane.f32.xlu0 %v21
    %v23 = vpop.xlane.xlu0 %22
    %v24 = vsub.f32 %v12, %v23
    %v25 = vmul.f32 %v24, 1.442695
    %v26 = vpow.pop %v25
    %v27 = vsel %vm20, %v26, 0.0
    %28 = vadd.xlane.f32.xlu0 %v27
    %v29 = vpop.xlane.xlu0 %28
    %v30 = vlog2.pop %v29
    %v31 = vmul.f32 %v30, 0.6931472
    %v32 = vadd.f32 %v23, %v31
    %v33 = vsel %vm19, %v12, 0.0
    %v34 = vsel %vm20, %v33, 0.0
    %35 = vadd.xlane.f32.xlu0 %v34
    %v36 = vpop.xlane.xlu0 %35
    %v37 = vsub.f32 %v32, %v36
    %v38 = vmax.f32 %v37, 0.0
    %v39 = vsub.f32 0.0, %v38
    %v40 = vmul.f32 %v39, 1.442695
    %v41 = vpow.pop %v40
    %v42 = vsub.f32 1.0, %v41
    %v43 = vmul.f32 %v42, %v42
    %v44 = vmul.f32 %v43, %v38
    %v45 = vlaneseq
    %v46 = vshrl.u32 %v45, 7
    %s47 = smul.u32 0, 8
    %v48 = vstv %s47
    %v49 = vadd.s32 %v46, %v48
    %vm50 = vcmp.lt.s32.totalorder %v49, 8
    %v51 = vsel %vm50, %v44, 0.0
    %vm52 = vcmask 7168
    %v53 = vsel %vm52, %v51, 0.0
    %54 = vadd.xlane.f32.xlu0 %v53
    %v55 = vpop.xlane.xlu0 %54
    %v56 = vrot.slane %v55, 4
    %v57 = vadd.f32 %v55, %v56
    %v58 = vrot.slane %v57, 2
    %v59 = vadd.f32 %v57, %v58
    %v60 = vrot.slane %v59, 1
    %v61 = vadd.f32 %v59, %v60
    %s62 = vtos %v61
    %v63 = vstv %s62
    %64 = vst [vmem:[#allocation2] sm:$0xff] %v63
    // Predicated region
    $region10: #{tpu_custom_call.1} parent=1 // pred_check
      _
    $region11: #{tpu_custom_call.1} parent=1 // pred_check_branch
      %66 = sbr.rel (0) target = $region13
    $region12: #{tpu_custom_call.1} parent=1 // pred_region
      %s68 = ssub.s32 128, 128
      %69 = vsyncadd [#allocation3], %s68
      %s71 = sshll.u32 [#allocation2], 4
      %s72 = int_to_ptr.vmem [resolvable:$true] %s71
      %74 = dma.vmem_to_hbm [thread:$0]  %s72, 128, %s2, [#allocation3]
    $region13: #{tpu_custom_call.1} parent=1 // pred_fallthru
      _
    // Predicated region
    $region14: #{tpu_custom_call.1} parent=1 // pred_check
      _
    $region15: #{tpu_custom_call.1} parent=1 // pred_check_branch
      %76 = sbr.rel (0) target = $region17
    $region16: #{tpu_custom_call.1} parent=1 // pred_region
      %77 = dma.done [#allocation3], 128
    $region17: #{tpu_custom_call.1} parent=1 // pred_fallthru
      _
    %78 = vsyncpa [#allocation3], 1

</llo_original>
